<compile_context>
chip_gen: v6e
topology: v6e:2x2x1
jax: 0.10.0
libtpu: 0.0.40
codegen_flags: <defaults>
</compile_context>

<pallas_src>
import functools

import jax
import jax.numpy as jnp
from jax.experimental import pallas as pl
from jax.experimental.pallas import tpu as pltpu


def _round_up(x: int, m: int) -> int:
    return ((x + m - 1) // m) * m


def _padded_n(N: int, block_n: int) -> int:
    # Lane-dense output; when N > block_n pad up to a block_n multiple so the
    # MXU-wide tn=block_n tile is kept (don't fall back to 128 on v6e/v7x).
    return _round_up(N, 128) if N <= block_n else _round_up(N, block_n)


def _pick_tk(D: int, block_k: int) -> int:
    """K tile over d_model: full D if small, else a 128-multiple divisor of D."""
    if D <= block_k:
        return D
    t = (block_k // 128) * 128
    while t >= 128:
        if D % t == 0:
            return t
        t -= 128
    return D  # D not a multiple of 128 -> no K tiling (full-dim block is legal)


def _dense_pass_kernel(*refs, n_in: int):
    # refs = (x_0 .. x_{n_in-1}, w, b, o, acc)
    #   x_j : (tm, tk)            activation tile of prev_output j
    #   w   : (n_in, D, tn)       full-K weight column for this N tile (resident)
    #   b   : (1, tn)  f32        bias tile
    #   o   : (tm, tn)            output tile
    #   acc : (tm, tn) f32        VMEM accumulator scratch
    x_refs = refs[:n_in]
    w_ref, b_ref, o_ref, acc_ref = refs[n_in:]

    k = pl.program_id(2)
    nk = pl.num_programs(2)
    tk = x_refs[0].shape[1]
    koff = pl.multiple_of(k * tk, tk)

    @pl.when(k == 0)
    def _init():
        acc_ref[...] = jnp.zeros_like(acc_ref)

    # Fused concat: every prev_output contributes a partial product into the
    # SAME f32 accumulator (MXU accumulation chain / in-place MRB on v7x).
    # Note: each dot contracts over tk (<= d_model); for very small d_model the
    # MXU is under-filled, but this op is HBM-bound so fusion (no concat
    # buffer) wins over re-packing activations for a deeper contraction.
    for j in range(n_in):
        acc_ref[...] += jnp.dot(
            x_refs[j][...],
            w_ref[j, pl.ds(koff, tk), :],
            preferred_element_type=jnp.float32,
        )

    @pl.when(k == nk - 1)
    def _finalize():
        o_ref[...] = (acc_ref[...] + b_ref[...]).astype(o_ref.dtype)


def prepare_dense_pass_params(weight_t, bias, n_in, *, block_n: int = 256,
                              compute_dtype=None):
    """One-time layout prep (call OUTSIDE the jitted forward).

    weight_t: (d_model*n_in, d_model)  -- transpose of torch Linear.weight
    bias:     (d_model,)
    Returns (w3, b2): w3 (n_in, d_model, N_pad), b2 (1, N_pad) float32.
    """
    K, N = weight_t.shape
    assert K % n_in == 0, "weight rows must be d_model * n_in"
    D = K // n_in
    assert N == D, "DensePass expects Linear(d_model*n_in, d_model)"
    N_pad = _padded_n(N, block_n)

    w3 = weight_t.reshape(n_in, D, N)
    if compute_dtype is not None:
        w3 = w3.astype(compute_dtype)          # bf16 streaming on v5e/v6e/v7x
    b = bias.astype(jnp.float32)
    if N_pad != N:
        w3 = jnp.pad(w3, ((0, 0), (0, 0), (0, N_pad - N)))
        b = jnp.pad(b, (0, N_pad - N))
    return w3, b.reshape(1, N_pad)


@functools.partial(
    jax.jit, static_argnames=("block_m", "block_n", "block_k", "compute_dtype")
)
def dense_pass(prev_outputs, w3, b2, *, block_m: int = 256, block_n: int = 256,
               block_k: int = 512, compute_dtype=None):
    """DensePass forward.

    prev_outputs: tuple of n_in arrays, each (batch, seq, d_model)
    w3, b2:       prepared params from prepare_dense_pass_params
    returns:      (batch, seq, d_model)
    """
    prev_outputs = tuple(prev_outputs)
    n_in = len(prev_outputs)
    B, S, D = prev_outputs[0].shape
    for x in prev_outputs:
        assert x.shape == (B, S, D), "all prev_outputs must share one shape"
        assert x.dtype == prev_outputs[0].dtype, "all prev_outputs must share one dtype"
    assert w3.shape[0] == n_in and w3.shape[1] == D, "weight/params mismatch"

    N = D                               # Linear(d_model*n_in, d_model)
    N_pad = w3.shape[2]
    out_dtype = prev_outputs[0].dtype
    M = B * S

    # Free, contiguous reshape -- NO HBM padding copy of the activations.
    xs = [x.reshape(M, D) for x in prev_outputs]
    if compute_dtype is not None and xs[0].dtype != jnp.dtype(compute_dtype):
        xs = [x.astype(compute_dtype) for x in xs]   # bf16 streaming (f32 accum)

    x_itemsize = jnp.dtype(xs[0].dtype).itemsize
    w_itemsize = jnp.dtype(w3.dtype).itemsize
    o_itemsize = jnp.dtype(out_dtype).itemsize

    # ---- tile sizes ----------------------------------------------------------
    # Weight residency: if the whole (double-buffered) weight fits a ~20 MiB
    # budget, use a single N tile so the weight is DMA'd exactly once per call.
    if 2 * n_in * D * N_pad * w_itemsize <= 20 * 2**20 and N_pad <= 2048:
        tn = N_pad
    else:
        tn = block_n if N_pad > block_n else N_pad
    n_tiles = N_pad // tn

    tm = M if M <= block_m else block_m
    m_tiles = pl.cdiv(M, tm)
    # Megacore occupancy (v7x has 2 TensorCores): avoid a 1-tile parallel grid.
    if m_tiles * n_tiles == 1 and M >= 16 and M % 16 == 0:
        tm = M // 2
        m_tiles = 2

    tk = _pick_tk(D, block_k)           # tk always divides D exactly (or == D)
    k_tiles = D // tk

    grid = (n_tiles, m_tiles, k_tiles)  # weight rides the OUTERMOST axis

    in_specs = (
        [pl.BlockSpec((tm, tk), lambda n, m, k: (m, k)) for _ in range(n_in)]
        + [
            # Full-K weight column, indexed only by the outer N axis -> stays
            # VMEM-resident across the entire inner (M, K) sweep; no re-DMA.
            pl.BlockSpec((n_in, D, tn), lambda n, m, k: (0, 0, n)),
            pl.BlockSpec((1, tn), lambda n, m, k: (0, n)),
        ]
    )
    out_specs = pl.BlockSpec((tm, tn), lambda n, m, k: (m, n))

    # VMEM budget from the actual (double-buffered) tile footprint + margin.
    footprint = (
        2 * n_in * tm * tk * x_itemsize        # activation tiles
        + 2 * n_in * D * tn * w_itemsize       # resident weight column
        + 2 * tn * 4                           # bias
        + 2 * tm * tn * o_itemsize             # output tile
        + tm * tn * 4                          # f32 accumulator scratch
    )
    vmem_limit = int(min(96 * 2**20, max(24 * 2**20, footprint + 8 * 2**20)))

    flops = 2 * M * (n_in * D) * N_pad
    bytes_accessed = (
        n_tiles * sum(x.size * x_itemsize for x in xs)   # acts re-streamed per N tile
        + w3.size * w_itemsize                           # weight fetched once
        + b2.size * 4
        + M * N_pad * o_itemsize
    )

    out_pad = pl.pallas_call(
        functools.partial(_dense_pass_kernel, n_in=n_in),
        out_shape=jax.ShapeDtypeStruct((M, N_pad), out_dtype),
        grid=grid,
        in_specs=in_specs,
        out_specs=out_specs,
        scratch_shapes=[pltpu.VMEM((tm, tn), jnp.float32)],
        compiler_params=pltpu.CompilerParams(
            dimension_semantics=("parallel", "parallel", "arbitrary"),
            vmem_limit_bytes=vmem_limit,
        ),
        cost_estimate=pl.CostEstimate(
            flops=flops, transcendentals=0, bytes_accessed=bytes_accessed
        ),
    )(*xs, w3, b2)

    out = out_pad[:, :N] if N_pad != N else out_pad
    return out.reshape(B, S, N)


def init_dense_pass_params(key, d_model, n_in, dtype=jnp.float32):
    """Deterministic init mimicking nn.Linear defaults (U(-1/sqrt(fan_in), +))."""
    fan_in = d_model * n_in
    bound = 1.0 / jnp.sqrt(jnp.asarray(fan_in, dtype=jnp.float32))
    k_w, k_b = jax.random.split(key)
    # torch stores weight as (out, in); we store the transpose (in, out).
    weight_t = jax.random.uniform(
        k_w, (fan_in, d_model), dtype=dtype, minval=-bound, maxval=bound
    )
    bias = jax.random.uniform(
        k_b, (d_model,), dtype=dtype, minval=-bound, maxval=bound
    )
    return weight_t, bias


if __name__ == "__main__":
    key = jax.random.PRNGKey(0)
    batch, seq, d_model, n_in = 2, 8, 32, 3

    k_params, *k_inputs = jax.random.split(key, 1 + n_in)
    weight_t, bias = init_dense_pass_params(k_params, d_model, n_in)

    prev_outputs = tuple(
        jax.random.normal(k, (batch, seq, d_model), dtype=jnp.float32)
        for k in k_inputs
    )

    # Reference in plain JAX (same math as torch: cat + x @ W^T + b).
    x_cat = jnp.concatenate(prev_outputs, axis=-1)
    ref = x_cat @ weight_t + bias

    # f32 path
    w3, b2 = prepare_dense_pass_params(weight_t, bias, n_in)
    out = dense_pass(prev_outputs, w3, b2)
    jax.block_until_ready(out)
    assert out.shape == (batch, seq, d_model)
    assert jnp.allclose(out, ref, atol=1e-4, rtol=1e-4)

    # bf16-streaming path (v6e/v7x HBM-bandwidth optimization), f32 accumulate.
    w3_bf, b2_bf = prepare_dense_pass_params(
        weight_t, bias, n_in, compute_dtype=jnp.bfloat16
    )
    out_bf = dense_pass(prev_outputs, w3_bf, b2_bf, compute_dtype=jnp.bfloat16)
    jax.block_until_ready(out_bf)
    assert out_bf.shape == (batch, seq, d_model)
    assert jnp.allclose(out_bf, ref, atol=5e-2, rtol=5e-2)

    print("KERNEL_OK")
</pallas_src>

<mosaic_0001>
module attributes {stable_mosaic.version = 11 : i64} {
  func.func @_dense_pass_kernel(%arg0: i32, %arg1: i32, %arg2: i32, %arg3: memref<8x32xf32, #tpu.memory_space<vmem>>, %arg4: memref<8x32xf32, #tpu.memory_space<vmem>>, %arg5: memref<8x32xf32, #tpu.memory_space<vmem>>, %arg6: memref<3x32x128xf32, #tpu.memory_space<vmem>>, %arg7: memref<1x128xf32, #tpu.memory_space<vmem>>, %arg8: memref<8x128xf32, #tpu.memory_space<vmem>>, %arg9: memref<8x128xf32, #tpu.memory_space<vmem>>) attributes {dimension_semantics = [#tpu.dimension_semantics<parallel>, #tpu.dimension_semantics<parallel>, #tpu.dimension_semantics<arbitrary>], iteration_bounds = array<i64: 1, 2, 1>, scalar_prefetch = 0 : i64, scratch_operands = 1 : i64, tpu.core_type = #tpu.core_type<tc>, window_params = [{transform_indices = @transform_0, window_bounds = array<i64: 8, 32>}, {transform_indices = @transform_1, window_bounds = array<i64: 8, 32>}, {transform_indices = @transform_2, window_bounds = array<i64: 8, 32>}, {transform_indices = @transform_3, window_bounds = array<i64: 3, 32, 128>}, {transform_indices = @transform_4, window_bounds = array<i64: 1, 128>}, {transform_indices = @transform_5, window_bounds = array<i64: 8, 128>}]} {
    %c32_i32 = arith.constant 32 : i32
    %0 = arith.muli %arg2, %c32_i32 : i32
    %1 = tpu.assume_multiple %0, 32 : i32
    %c0_i32 = arith.constant 0 : i32
    %2 = arith.cmpi eq, %arg2, %c0_i32 : i32
    %3 = arith.extui %2 : i1 to i32
    %c0_i32_0 = arith.constant 0 : i32
    %4 = arith.cmpi ne, %3, %c0_i32_0 : i32
    scf.if %4 {
      %cst_26 = arith.constant 0.000000e+00 : f32
      %32 = vector.broadcast %cst_26 : f32 to vector<8x128xf32>
      %c0_27 = arith.constant 0 : index
      %c0_28 = arith.constant 0 : index
      %33 = vector.load %arg9[%c0_27, %c0_28] : memref<8x128xf32, #tpu.memory_space<vmem>>, vector<8x128xf32>
      tpu.vector_store %arg9[%c0_27, %c0_28], %32 {strides = array<i32>} : memref<8x128xf32, #tpu.memory_space<vmem>>, vector<8x128xf32>,
    } else {
    }
    %c0 = arith.constant 0 : index
    %c0_1 = arith.constant 0 : index
    %5 = vector.load %arg9[%c0, %c0_1] : memref<8x128xf32, #tpu.memory_space<vmem>>, vector<8x128xf32>
    %c0_2 = arith.constant 0 : index
    %c0_3 = arith.constant 0 : index
    %6 = vector.load %arg3[%c0_2, %c0_3] : memref<8x32xf32, #tpu.memory_space<vmem>>, vector<8x32xf32>
    %c0_4 = arith.constant 0 : index
    %7 = arith.index_cast %1 : i32 to index
    %c0_5 = arith.constant 0 : index
    %8 = vector.load %arg6[%c0_4, %7, %c0_5] : memref<3x32x128xf32, #tpu.memory_space<vmem>>, vector<1x32x128xf32>
    %9 = vector.shape_cast %8 : vector<1x32x128xf32> to vector<32x128xf32>
    %cst = arith.constant dense<0.000000e+00> : vector<8x128xf32>
    %10 = tpu.matmul %6, %9, %cst {dimension_numbers = #tpu.dot_dimension_numbers<[1], [0], [0], [1], [0, 0, 1, 1], [], []>} : vector<8x32xf32>, vector<32x128xf32>, vector<8x128xf32> -> vector<8x128xf32>
    %11 = arith.addf %5, %10 : vector<8x128xf32>
    %c0_6 = arith.constant 0 : index
    %c0_7 = arith.constant 0 : index
    %12 = vector.load %arg9[%c0_6, %c0_7] : memref<8x128xf32, #tpu.memory_space<vmem>>, vector<8x128xf32>
    tpu.vector_store %arg9[%c0_6, %c0_7], %11 {strides = array<i32>} : memref<8x128xf32, #tpu.memory_space<vmem>>, vector<8x128xf32>,
    %c0_8 = arith.constant 0 : index
    %c0_9 = arith.constant 0 : index
    %13 = vector.load %arg9[%c0_8, %c0_9] : memref<8x128xf32, #tpu.memory_space<vmem>>, vector<8x128xf32>
    %c0_10 = arith.constant 0 : index
    %c0_11 = arith.constant 0 : index
    %14 = vector.load %arg4[%c0_10, %c0_11] : memref<8x32xf32, #tpu.memory_space<vmem>>, vector<8x32xf32>
    %c1 = arith.constant 1 : index
    %15 = arith.index_cast %1 : i32 to index
    %c0_12 = arith.constant 0 : index
    %16 = vector.load %arg6[%c1, %15, %c0_12] : memref<3x32x128xf32, #tpu.memory_space<vmem>>, vector<1x32x128xf32>
    %17 = vector.shape_cast %16 : vector<1x32x128xf32> to vector<32x128xf32>
    %cst_13 = arith.constant dense<0.000000e+00> : vector<8x128xf32>
    %18 = tpu.matmul %14, %17, %cst_13 {dimension_numbers = #tpu.dot_dimension_numbers<[1], [0], [0], [1], [0, 0, 1, 1], [], []>} : vector<8x32xf32>, vector<32x128xf32>, vector<8x128xf32> -> vector<8x128xf32>
    %19 = arith.addf %13, %18 : vector<8x128xf32>
    %c0_14 = arith.constant 0 : index
    %c0_15 = arith.constant 0 : index
    %20 = vector.load %arg9[%c0_14, %c0_15] : memref<8x128xf32, #tpu.memory_space<vmem>>, vector<8x128xf32>
    tpu.vector_store %arg9[%c0_14, %c0_15], %19 {strides = array<i32>} : memref<8x128xf32, #tpu.memory_space<vmem>>, vector<8x128xf32>,
    %c0_16 = arith.constant 0 : index
    %c0_17 = arith.constant 0 : index
    %21 = vector.load %arg9[%c0_16, %c0_17] : memref<8x128xf32, #tpu.memory_space<vmem>>, vector<8x128xf32>
    %c0_18 = arith.constant 0 : index
    %c0_19 = arith.constant 0 : index
    %22 = vector.load %arg5[%c0_18, %c0_19] : memref<8x32xf32, #tpu.memory_space<vmem>>, vector<8x32xf32>
    %c2 = arith.constant 2 : index
    %23 = arith.index_cast %1 : i32 to index
    %c0_20 = arith.constant 0 : index
    %24 = vector.load %arg6[%c2, %23, %c0_20] : memref<3x32x128xf32, #tpu.memory_space<vmem>>, vector<1x32x128xf32>
    %25 = vector.shape_cast %24 : vector<1x32x128xf32> to vector<32x128xf32>
    %cst_21 = arith.constant dense<0.000000e+00> : vector<8x128xf32>
    %26 = tpu.matmul %22, %25, %cst_21 {dimension_numbers = #tpu.dot_dimension_numbers<[1], [0], [0], [1], [0, 0, 1, 1], [], []>} : vector<8x32xf32>, vector<32x128xf32>, vector<8x128xf32> -> vector<8x128xf32>
    %27 = arith.addf %21, %26 : vector<8x128xf32>
    %c0_22 = arith.constant 0 : index
    %c0_23 = arith.constant 0 : index
    %28 = vector.load %arg9[%c0_22, %c0_23] : memref<8x128xf32, #tpu.memory_space<vmem>>, vector<8x128xf32>
    tpu.vector_store %arg9[%c0_22, %c0_23], %27 {strides = array<i32>} : memref<8x128xf32, #tpu.memory_space<vmem>>, vector<8x128xf32>,
    %c0_i32_24 = arith.constant 0 : i32
    %29 = arith.cmpi eq, %arg2, %c0_i32_24 : i32
    %30 = arith.extui %29 : i1 to i32
    %c0_i32_25 = arith.constant 0 : i32
    %31 = arith.cmpi ne, %30, %c0_i32_25 : i32
    scf.if %31 {
      %c0_26 = arith.constant 0 : index
      %c0_27 = arith.constant 0 : index
      %32 = vector.load %arg9[%c0_26, %c0_27] : memref<8x128xf32, #tpu.memory_space<vmem>>, vector<8x128xf32>
      %c0_28 = arith.constant 0 : index
      %c0_29 = arith.constant 0 : index
      %33 = vector.load %arg7[%c0_28, %c0_29] : memref<1x128xf32, #tpu.memory_space<vmem>>, vector<1x128xf32>
      %34 = vector.broadcast %33 : vector<1x128xf32> to vector<8x128xf32>
      %35 = arith.addf %32, %34 : vector<8x128xf32>
      %c0_30 = arith.constant 0 : index
      %c0_31 = arith.constant 0 : index
      %36 = vector.load %arg8[%c0_30, %c0_31] : memref<8x128xf32, #tpu.memory_space<vmem>>, vector<8x128xf32>
      tpu.vector_store %arg8[%c0_30, %c0_31], %35 {strides = array<i32>} : memref<8x128xf32, #tpu.memory_space<vmem>>, vector<8x128xf32>,
    } else {
    }
    return
  }
  func.func @transform_0(%arg0: i32, %arg1: i32, %arg2: i32) -> (i32, i32) {
    %c0_i32 = arith.constant 0 : i32
    return %arg1, %arg2 : i32, i32
  }
  func.func @transform_1(%arg0: i32, %arg1: i32, %arg2: i32) -> (i32, i32) {
    %c0_i32 = arith.constant 0 : i32
    return %arg1, %arg2 : i32, i32
  }
  func.func @transform_2(%arg0: i32, %arg1: i32, %arg2: i32) -> (i32, i32) {
    %c0_i32 = arith.constant 0 : i32
    return %arg1, %arg2 : i32, i32
  }
  func.func @transform_3(%arg0: i32, %arg1: i32, %arg2: i32) -> (i32, i32, i32) {
    %c0_i32 = arith.constant 0 : i32
    %c0_i32_0 = arith.constant 0 : i32
    %c0_i32_1 = arith.constant 0 : i32
    return %c0_i32, %c0_i32_0, %arg0 : i32, i32, i32
  }
  func.func @transform_4(%arg0: i32, %arg1: i32, %arg2: i32) -> (i32, i32) {
    %c0_i32 = arith.constant 0 : i32
    %c0_i32_0 = arith.constant 0 : i32
    return %c0_i32, %arg0 : i32, i32
  }
  func.func @transform_5(%arg0: i32, %arg1: i32, %arg2: i32) -> (i32, i32) {
    %c0_i32 = arith.constant 0 : i32
    return %arg1, %arg0 : i32, i32
  }
}

</mosaic_0001>

<llo_original>
// kernel: dense_pass.1
$region0: #{dense_pass.1}
  #allocation0 [shape = 'u32[]', space=smem, size = 0x4, offset = 0x4, fixed_abs, tag = 'smem constant byte address 0x4 - core index']
  #allocation1 [shape = 'u32[144,128]{1,0:T(1,128)}', space=vmem, size = 0x12000, scoped, tag = 'internal scratch']
  #allocation2 [shape = 'f32[8,128]{1,0:T(8,128)}', space=vmem, size = 0x1000, scoped, tag = 'scratch operand']
  %s0 = inlined_call_operand.hbm [shape: f32[16,32], index: 0, kind: input, shape index: {}]
  %s1 = inlined_call_operand.hbm [shape: f32[16,32], index: 1, kind: input, shape index: {}]
  %s2 = inlined_call_operand.hbm [shape: f32[16,32], index: 2, kind: input, shape index: {}]
  %s3 = inlined_call_operand.hbm [shape: f32[3,32,128], index: 3, kind: input, shape index: {}]
  %s4 = inlined_call_operand.vmem [shape: f32[1,128], index: 4, kind: input, shape index: {}]
  %s5 = inlined_call_operand.vmem [shape: f32[16,128], index: 5, kind: output, shape index: {}]
  %s6 = sld [smem:[#allocation0]]
  $region77: #{dense_pass.1} parent=0
    _
  %s8 = ssub.s32 1, %s6
  %s9 = scalar_select 0, %s8, %s6
  $region1: #{dense_pass.1} parent=0
    #allocation3 [shape = 'u8[8192]{0}', space=vmem, size = 0x2000, scoped, tag = 'input window, operand 0']
    #allocation4 [shape = 's32[2]{0}', space=sflag, size = 0x8, scoped, tag = 'scoped memory for dense_pass.1']
    #allocation5 [shape = 'u8[8192]{0}', space=vmem, size = 0x2000, scoped, tag = 'input window, operand 1']
    #allocation6 [shape = 's32[2]{0}', space=sflag, size = 0x8, scoped, tag = 'scoped memory for dense_pass.1']
    #allocation7 [shape = 'u8[8192]{0}', space=vmem, size = 0x2000, scoped, tag = 'input window, operand 2']
    #allocation8 [shape = 'u8[49152]{0}', space=vmem, size = 0xc000, scoped, tag = 'input window, operand 3, single buffered']
    #allocation9 [shape = 's32[1]{0}', space=sflag, size = 0x4, scoped, tag = 'scoped memory for dense_pass.1']
    %10 = vsyncpa [#allocation4], 0
    %s11 = scalar_lea.sflag [#allocation4], 1
    %12 = vsyncpa %s11, 0
    %13 = vsyncpa [#allocation6], 0
    %s14 = scalar_lea.sflag [#allocation6], 1
    %15 = vsyncpa %s14, 0
    %16 = vsyncpa [#allocation9], 0
    loop: start=0, step=1, limit=4
    $region2: #{dense_pass.1} parent=1 // loop_pre_header
      _
    $region3: #{dense_pass.1} parent=1 // loop_header
      %s18 = sphi 0, %s22
      %p19 = scmp.ge.s32.totalorder %s18, 4
      %s25 = sphi 0, %s44
      %s26 = sphi 0, %s40
      %s27 = sphi 0, %s36
      %s28 = sphi 0, %s25
      %s29 = sphi 0, %s26
      %s30 = sphi 0, %s27
      %s31 = sphi 0, %s28
      %s32 = sphi 0, %s29
      %s33 = sphi 0, %s30
      %s49 = sphi 0, %s51
      %s52 = sphi 0, %s49
      %s53 = sphi 0, %s52
      %s69 = sphi 0, %s53
      %s77 = sphi 0, %s79
      %s80 = sphi 0, %s77
      %s81 = sphi 0, %s80
      %s97 = sphi 0, %s81
      %s105 = sphi 0, %s107
      %s108 = sphi 0, %s105
      %s109 = sphi 0, %s108
      %s125 = sphi 0, %s109
      %s131 = sphi 0, %s133
      %s134 = sphi 0, %s131
      %s135 = sphi 0, %s134
      %s151 = sphi 0, %s135
      %s157 = sphi 0, %s159
      %s160 = sphi 0, %s157
      %s161 = sphi 0, %s160
      %s177 = sphi 0, %s161
      %s185 = sphi 0, %s187
      %s188 = sphi 0, %s185
      %s189 = sphi 0, %s188
      %s205 = sphi 0, %s189
    $region4: #{dense_pass.1} parent=1 // loop_header_branch
      %21 = sbr.rel (%p19) target = $region8
    $region5: #{dense_pass.1} parent=1 // loop_body
      %s23 = ssub.s32 %s18, 1
      %s24 = ssub.s32 %s18, 2
      %s34 = sadd.s32 1, %s27
      %p35 = scmp.ge.s32.totalorder %s34, 1
      %s36 = scalar_select %p35, 0, %s34
      %s37 = sadd.s32 1, %s26
      %s38 = scalar_select %p35, %s37, %s26
      %p39 = scmp.ge.s32.totalorder %s38, 2
      %s40 = scalar_select %p39, 0, %s38
      %s41 = sadd.s32 1, %s25
      %s42 = scalar_select %p39, %s41, %s25
      %p43 = scmp.ge.s32.totalorder %s42, 1
      %s44 = scalar_select %p43, 0, %s42
      %s45 = ssub.s32 %s26, %s40
      %s46 = ssub.s32 %s27, %s36
      %s47 = sor.u32 %s45, %s46
      %p48 = scmp.eq.s32.totalorder %s47, 0
      %s50 = sadd.s32 %s49, 1
      %s51 = scalar_select %p48, %s49, %s50
      %p54 = pneg %p48
      %p55 = scmp.eq.s32.totalorder %s18, 1
      %p56 = por %p54, %p55
      %p57 = scmp.ne.s32.totalorder %s49, %s52
      %p58 = scmp.eq.s32.totalorder %s18, 0
      %p59 = por %p57, %p58
      %p60 = scmp.ne.s32.totalorder %s49, %s52
      %p61 = scmp.eq.s32.totalorder %s23, 1
      %p62 = por %p60, %p61
      %p63 = scmp.ne.s32.totalorder %s52, %s53
      %p64 = scmp.eq.s32.totalorder %s23, 0
      %p65 = por %p63, %p64
      %p66 = scmp.ne.s32.totalorder %s52, %s53
      %p67 = scmp.eq.s32.totalorder %s24, 1
      %p68 = por %p66, %p67
      %p70 = scmp.ne.s32.totalorder %s53, %s69
      %p71 = scmp.eq.s32.totalorder %s24, 0
      %p72 = por %p70, %p71
      %s73 = ssub.s32 %s26, %s40
      %s74 = ssub.s32 %s27, %s36
      %s75 = sor.u32 %s73, %s74
      %p76 = scmp.eq.s32.totalorder %s75, 0
      %s78 = sadd.s32 %s77, 1
      %s79 = scalar_select %p76, %s77, %s78
      %p82 = pneg %p76
      %p83 = scmp.eq.s32.totalorder %s18, 1
      %p84 = por %p82, %p83
      %p85 = scmp.ne.s32.totalorder %s77, %s80
      %p86 = scmp.eq.s32.totalorder %s18, 0
      %p87 = por %p85, %p86
      %p88 = scmp.ne.s32.totalorder %s77, %s80
      %p89 = scmp.eq.s32.totalorder %s23, 1
      %p90 = por %p88, %p89
      %p91 = scmp.ne.s32.totalorder %s80, %s81
      %p92 = scmp.eq.s32.totalorder %s23, 0
      %p93 = por %p91, %p92
      %p94 = scmp.ne.s32.totalorder %s80, %s81
      %p95 = scmp.eq.s32.totalorder %s24, 1
      %p96 = por %p94, %p95
      %p98 = scmp.ne.s32.totalorder %s81, %s97
      %p99 = scmp.eq.s32.totalorder %s24, 0
      %p100 = por %p98, %p99
      %s101 = ssub.s32 %s26, %s40
      %s102 = ssub.s32 %s27, %s36
      %s103 = sor.u32 %s101, %s102
      %p104 = scmp.eq.s32.totalorder %s103, 0
      %s106 = sadd.s32 %s105, 1
      %s107 = scalar_select %p104, %s105, %s106
      %p110 = pneg %p104
      %p111 = scmp.eq.s32.totalorder %s18, 1
      %p112 = por %p110, %p111
      %p113 = scmp.ne.s32.totalorder %s105, %s108
      %p114 = scmp.eq.s32.totalorder %s18, 0
      %p115 = por %p113, %p114
      %p116 = scmp.ne.s32.totalorder %s105, %s108
      %p117 = scmp.eq.s32.totalorder %s23, 1
      %p118 = por %p116, %p117
      %p119 = scmp.ne.s32.totalorder %s108, %s109
      %p120 = scmp.eq.s32.totalorder %s23, 0
      %p121 = por %p119, %p120
      %p122 = scmp.ne.s32.totalorder %s108, %s109
      %p123 = scmp.eq.s32.totalorder %s24, 1
      %p124 = por %p122, %p123
      %p126 = scmp.ne.s32.totalorder %s109, %s125
      %p127 = scmp.eq.s32.totalorder %s24, 0
      %p128 = por %p126, %p127
      %s129 = ssub.s32 %s25, %s44
      %p130 = scmp.eq.s32.totalorder %s129, 0
      %s132 = sadd.s32 %s131, 1
      %s133 = scalar_select %p130, %s131, %s132
      %p136 = pneg %p130
      %p137 = scmp.eq.s32.totalorder %s18, 1
      %p138 = por %p136, %p137
      %p139 = scmp.ne.s32.totalorder %s131, %s134
      %p140 = scmp.eq.s32.totalorder %s18, 0
      %p141 = por %p139, %p140
      %p142 = scmp.ne.s32.totalorder %s131, %s134
      %p143 = scmp.eq.s32.totalorder %s23, 1
      %p144 = por %p142, %p143
      %p145 = scmp.ne.s32.totalorder %s134, %s135
      %p146 = scmp.eq.s32.totalorder %s23, 0
      %p147 = por %p145, %p146
      %p148 = scmp.ne.s32.totalorder %s134, %s135
      %p149 = scmp.eq.s32.totalorder %s24, 1
      %p150 = por %p148, %p149
      %p152 = scmp.ne.s32.totalorder %s135, %s151
      %p153 = scmp.eq.s32.totalorder %s24, 0
      %p154 = por %p152, %p153
      %s155 = ssub.s32 %s25, %s44
      %p156 = scmp.eq.s32.totalorder %s155, 0
      %s158 = sadd.s32 %s157, 1
      %s159 = scalar_select %p156, %s157, %s158
      %p162 = pneg %p156
      %p163 = scmp.eq.s32.totalorder %s18, 1
      %p164 = por %p162, %p163
      %p165 = scmp.ne.s32.totalorder %s157, %s160
      %p166 = scmp.eq.s32.totalorder %s18, 0
      %p167 = por %p165, %p166
      %p168 = scmp.ne.s32.totalorder %s157, %s160
      %p169 = scmp.eq.s32.totalorder %s23, 1
      %p170 = por %p168, %p169
      %p171 = scmp.ne.s32.totalorder %s160, %s161
      %p172 = scmp.eq.s32.totalorder %s23, 0
      %p173 = por %p171, %p172
      %p174 = scmp.ne.s32.totalorder %s160, %s161
      %p175 = scmp.eq.s32.totalorder %s24, 1
      %p176 = por %p174, %p175
      %p178 = scmp.ne.s32.totalorder %s161, %s177
      %p179 = scmp.eq.s32.totalorder %s24, 0
      %p180 = por %p178, %p179
      %s181 = ssub.s32 %s26, %s40
      %s182 = ssub.s32 %s25, %s44
      %s183 = sor.u32 %s181, %s182
      %p184 = scmp.eq.s32.totalorder %s183, 0
      %s186 = sadd.s32 %s185, 1
      %s187 = scalar_select %p184, %s185, %s186
      %p190 = pneg %p184
      %p191 = scmp.eq.s32.totalorder %s18, 1
      %p192 = por %p190, %p191
      %p193 = scmp.ne.s32.totalorder %s185, %s188
      %p194 = scmp.eq.s32.totalorder %s18, 0
      %p195 = por %p193, %p194
      %p196 = scmp.ne.s32.totalorder %s185, %s188
      %p197 = scmp.eq.s32.totalorder %s23, 1
      %p198 = por %p196, %p197
      %p199 = scmp.ne.s32.totalorder %s188, %s189
      %p200 = scmp.eq.s32.totalorder %s23, 0
      %p201 = por %p199, %p200
      %p202 = scmp.ne.s32.totalorder %s188, %s189
      %p203 = scmp.eq.s32.totalorder %s24, 1
      %p204 = por %p202, %p203
      %p206 = scmp.ne.s32.totalorder %s189, %s205
      %p207 = scmp.eq.s32.totalorder %s24, 0
      %p208 = por %p206, %p207
      %p209 = scmp.le.s32.totalorder 1, %s18
      %p210 = scmp.lt.s32.totalorder %s18, 3
      %p211 = pnand %p209, %p210
      %p212 = pneg %p211
      // Predicated region
      $region9: #{dense_pass.1} parent=5 // pred_check
        _
      $region10: #{dense_pass.1} parent=5 // pred_check_branch
        %214 = sbr.rel (%p211) target = $region12
      $region11: #{dense_pass.1} parent=5 // pred_region
        %s215 = ssub.s32 %s18, 1
        // Predicated region
        $region13: #{dense_pass.1} parent=11 // pred_check
          %p216 = pneg %p147
        $region14: #{dense_pass.1} parent=11 // pred_check_branch
          %218 = sbr.rel (%p216) target = $region16
        $region15: #{dense_pass.1} parent=11 // pred_region
          %s220 = ssub.s32 1536, 1536
          %221 = vsyncadd [#allocation9], %s220
          %s222 = smul.addr %s28, 128
          %s223 = scalar_lea.hbm %s3, %s222
          %s224 = sshll.u32 [#allocation8], 4
          %s225 = int_to_ptr.vmem [resolvable:$true] %s224
          %230 = dma.hbm_to_vmem [thread:$0]  %s223, 1536, %s225, [#allocation9], 128, 128, 8
        $region16: #{dense_pass.1} parent=11 // pred_fallthru
          _
        // Predicated region
        $region17: #{dense_pass.1} parent=11 // pred_check
          %p231 = pneg %p173
        $region18: #{dense_pass.1} parent=11 // pred_check_branch
          %233 = sbr.rel (%p231) target = $region20
        $region19: #{dense_pass.1} parent=11 // pred_region
          %p234 = scmp.lt.s32.totalorder %s28, 0
          %s235 = scalar_select %p234, %s28, 0
          %s236 = scalar_lea.vmem %s4, %s235
        $region20: #{dense_pass.1} parent=11 // pred_fallthru
          _
      $region12: #{dense_pass.1} parent=5 // pred_fallthru
        _
      %p237 = scmp.lt.s32.totalorder %s18, 2
      // Predicated region
      $region21: #{dense_pass.1} parent=5 // pred_check
        %p238 = pneg %p237
      $region22: #{dense_pass.1} parent=5 // pred_check_branch
        %240 = sbr.rel (%p238) target = $region24
      $region23: #{dense_pass.1} parent=5 // pred_region
        // Predicated region
        $region25: #{dense_pass.1} parent=23 // pred_check
          %p241 = pneg %p59
        $region26: #{dense_pass.1} parent=23 // pred_check_branch
          %243 = sbr.rel (%p241) target = $region28
        $region27: #{dense_pass.1} parent=23 // pred_region
          %s244 = sand.u32 %s49, 1
          %s245 = scalar_lea.sflag [#allocation4], %s244
          %s246 = sand.u32 %s49, 1
          %s247 = smul.addr %s246, 8
          %s248 = scalar_lea.vmem [#allocation3], %s247
          %s250 = ssub.s32 128, 128
          %251 = vsyncadd %s245, %s250
          %s252 = sadd.s32 %s27, %s26
          %s253 = smul.addr %s252, 128
          %s254 = scalar_lea.hbm %s0, %s253
          %s256 = sshll.u32 %s248, 4
          %s257 = int_to_ptr.vmem [resolvable:$true] %s256
          %259 = dma.hbm_to_vmem [thread:$0]  %s254, 128, %s257, %s245
        $region28: #{dense_pass.1} parent=23 // pred_fallthru
          _
        // Predicated region
        $region29: #{dense_pass.1} parent=23 // pred_check
          %p260 = pneg %p87
        $region30: #{dense_pass.1} parent=23 // pred_check_branch
          %262 = sbr.rel (%p260) target = $region32
        $region31: #{dense_pass.1} parent=23 // pred_region
          %s263 = sand.u32 %s18, 1
          %s264 = scalar_lea.sflag [#allocation6], %s263
          %s265 = sand.u32 %s77, 1
          %s266 = smul.addr %s265, 8
          %s267 = scalar_lea.vmem [#allocation5], %s266
          %s269 = ssub.s32 128, 128
          %270 = vsyncadd %s264, %s269
          %s271 = sadd.s32 %s27, %s26
          %s272 = smul.addr %s271, 128
          %s273 = scalar_lea.hbm %s1, %s272
          %s275 = sshll.u32 %s267, 4
          %s276 = int_to_ptr.vmem [resolvable:$true] %s275
          %278 = dma.hbm_to_vmem [thread:$0]  %s273, 128, %s276, %s264
        $region32: #{dense_pass.1} parent=23 // pred_fallthru
          _
        // Predicated region
        $region33: #{dense_pass.1} parent=23 // pred_check
          %p279 = pneg %p115
        $region34: #{dense_pass.1} parent=23 // pred_check_branch
          %281 = sbr.rel (%p279) target = $region36
        $region35: #{dense_pass.1} parent=23 // pred_region
          %s282 = sand.u32 %s18, 1
          %s283 = scalar_lea.sflag [#allocation6], %s282
          %s284 = sand.u32 %s105, 1
          %s285 = smul.addr %s284, 8
          %s286 = scalar_lea.vmem [#allocation7], %s285
          %s288 = ssub.s32 128, 128
          %289 = vsyncadd %s283, %s288
          %s290 = sadd.s32 %s27, %s26
          %s291 = smul.addr %s290, 128
          %s292 = scalar_lea.hbm %s2, %s291
          %s294 = sshll.u32 %s286, 4
          %s295 = int_to_ptr.vmem [resolvable:$true] %s294
          %297 = dma.hbm_to_vmem [thread:$0]  %s292, 128, %s295, %s283
        $region36: #{dense_pass.1} parent=23 // pred_fallthru
          _
      $region24: #{dense_pass.1} parent=5 // pred_fallthru
        _
      %p298 = scmp.le.s32.totalorder 1, %s18
      %p299 = scmp.lt.s32.totalorder %s18, 3
      %p300 = pnand %p298, %p299
      %p301 = pneg %p300
      // Predicated region
      $region37: #{dense_pass.1} parent=5 // pred_check
        _
      $region38: #{dense_pass.1} parent=5 // pred_check_branch
        %303 = sbr.rel (%p300) target = $region40
      $region39: #{dense_pass.1} parent=5 // pred_region
        %s304 = ssub.s32 %s18, 1
        %s305 = sand.u32 %s52, 1
        %s306 = scalar_lea.sflag [#allocation4], %s305
        %s307 = sand.u32 %s52, 1
        %s308 = smul.addr %s307, 8
        %s309 = scalar_lea.vmem [#allocation3], %s308
        // Predicated region
        $region41: #{dense_pass.1} parent=39 // pred_check
          %p310 = pneg %p65
        $region42: #{dense_pass.1} parent=39 // pred_check_branch
          %312 = sbr.rel (%p310) target = $region44
        $region43: #{dense_pass.1} parent=39 // pred_region
          %313 = dma.done %s306, 128
        $region44: #{dense_pass.1} parent=39 // pred_fallthru
          _
        %s314 = sand.u32 %s23, 1
        %s315 = scalar_lea.sflag [#allocation6], %s314
        %s316 = sand.u32 %s80, 1
        %s317 = smul.addr %s316, 8
        %s318 = scalar_lea.vmem [#allocation5], %s317
        // Predicated region
        $region45: #{dense_pass.1} parent=39 // pred_check
          %p319 = pneg %p93
        $region46: #{dense_pass.1} parent=39 // pred_check_branch
          %321 = sbr.rel (%p319) target = $region48
        $region47: #{dense_pass.1} parent=39 // pred_region
          %322 = dma.done %s315, 128
        $region48: #{dense_pass.1} parent=39 // pred_fallthru
          _
        %s323 = sand.u32 %s23, 1
        %s324 = scalar_lea.sflag [#allocation6], %s323
        %s325 = sand.u32 %s108, 1
        %s326 = smul.addr %s325, 8
        %s327 = scalar_lea.vmem [#allocation7], %s326
        // Predicated region
        $region49: #{dense_pass.1} parent=39 // pred_check
          %p328 = pneg %p121
        $region50: #{dense_pass.1} parent=39 // pred_check_branch
          %330 = sbr.rel (%p328) target = $region52
        $region51: #{dense_pass.1} parent=39 // pred_region
          %331 = dma.done %s324, 128
        $region52: #{dense_pass.1} parent=39 // pred_fallthru
          _
        // Predicated region
        $region53: #{dense_pass.1} parent=39 // pred_check
          %p332 = pneg %p147
        $region54: #{dense_pass.1} parent=39 // pred_check_branch
          %334 = sbr.rel (%p332) target = $region56
        $region55: #{dense_pass.1} parent=39 // pred_region
          %335 = dma.done [#allocation9], 1536
        $region56: #{dense_pass.1} parent=39 // pred_fallthru
          _
        %s336 = sand.u32 %s52, 1
        %s337 = scalar_lea.sflag [#allocation4], %s336
        %s338 = sand.u32 %s52, 1
        %s339 = smul.addr %s338, 8
        %s340 = scalar_lea.vmem [#allocation3], %s339
        %p341 = pneg %p65
        %p342 = pneg %p62
        %s343 = sand.u32 %s23, 1
        %s344 = scalar_lea.sflag [#allocation6], %s343
        %s345 = sand.u32 %s80, 1
        %s346 = smul.addr %s345, 8
        %s347 = scalar_lea.vmem [#allocation5], %s346
        %p348 = pneg %p93
        %p349 = pneg %p90
        %s350 = sand.u32 %s23, 1
        %s351 = scalar_lea.sflag [#allocation6], %s350
        %s352 = sand.u32 %s108, 1
        %s353 = smul.addr %s352, 8
        %s354 = scalar_lea.vmem [#allocation7], %s353
        %p355 = pneg %p121
        %p356 = pneg %p118
        %p357 = pneg %p147
        %p358 = pneg %p144
        %p359 = scmp.lt.s32.totalorder %s28, 0
        %s360 = scalar_select %p359, %s28, 0
        %s361 = scalar_lea.vmem %s4, %s360
        %p362 = pneg %p173
        %p363 = pneg %p170
        %p364 = pneg %p201
        %p365 = pneg %p198
        %p366 = scmp.lt.s32.totalorder %s29, 1
        %s367 = scalar_select %p366, %s29, 1
        %p368 = scmp.lt.s32.totalorder %s28, 0
        %s369 = scalar_select %p368, %s28, 0
        %s370 = sadd.s32 %s369, %s367
        %s371 = smul.addr %s370, 8
        %s372 = scalar_lea.vmem %s5, %s371
        %p373 = scmp.lt.s32.totalorder %s28, 0
        %s374 = scalar_select %p373, %s28, 0
        %s375 = scalar_lea.vmem %s4, %s374
        %p376 = scmp.lt.s32.totalorder %s29, 1
        %s377 = scalar_select %p376, %s29, 1
        %p378 = scmp.lt.s32.totalorder %s28, 0
        %s379 = scalar_select %p378, %s28, 0
        %s380 = sadd.s32 %s379, %s377
        %s381 = smul.addr %s380, 8
        %s382 = scalar_lea.vmem %s5, %s381
        %s383 = smul.u32 %s30, 32
        %p384 = scmp.eq.s32.totalorder %s30, 0
        // Predicated region
        $region57: #{dense_pass.1} parent=39 // pred_check
          %p385 = pneg %p384
        $region58: #{dense_pass.1} parent=39 // pred_check_branch
          %387 = sbr.rel (%p385) target = $region60
        $region59: #{dense_pass.1} parent=39 // pred_region
          %388 = vst [vmem:[#allocation2] sm:$0xff] 0.0
        $region60: #{dense_pass.1} parent=39 // pred_fallthru
          _
        %v389 = vld [vmem:[#allocation2] sm:$0xff]
        %v390 = vld [vmem:[%s309] sm:$0xff]
        %s391 = scalar_lea.vmem [#allocation8], %s383
        %v392 = vld [vmem:[%s391] sm:$0xff]
        %v393 = vld [vmem:[%s391 + $0x8] sm:$0xff]
        %v394 = vld [vmem:[%s391 + $0x10] sm:$0xff]
        %v395 = vld [vmem:[%s391 + $0x18] sm:$0xff]
        %vm396 = vcmask 261120
        %v398 = vsel %vm396, %v390, 0
        %400 = vmatprep.subr.mxu0 0.0
        %401 = vmatpush1.msra.mxu0 0.0
        %402 = vmatprep.subr.mxu0 0.0
        %403 = vmatpush1.msra.mxu0 0.0
        %404 = vmatprep.subr.mxu0 0.0
        %405 = vmatpush1.msra.mxu0 0.0
        %406 = vmatprep.subr.mxu0 0.0
        %407 = vmatpush1.msra.mxu0 0.0
        %408 = vmatprep.subr.mxu0 0.0
        %409 = vmatpush1.msra.mxu0 0.0
        %410 = vmatprep.subr.mxu0 0.0
        %411 = vmatpush1.msra.mxu0 0.0
        %412 = vmatprep.subr.mxu0 0.0
        %413 = vmatpush1.msra.mxu0 0.0
        %414 = vmatprep.subr.mxu0 0.0
        %415 = vmatpush1.msra.mxu0 0.0
        %416 = vmatprep.subr.mxu0 0.0
        %417 = vmatpush1.msra.mxu0 0.0
        %418 = vmatprep.subr.mxu0 0.0
        %419 = vmatpush1.msra.mxu0 0.0
        %420 = vmatprep.subr.mxu0 0.0
        %421 = vmatpush1.msra.mxu0 0.0
        %422 = vmatprep.subr.mxu0 0.0
        %423 = vmatpush1.msra.mxu0 0.0
        %424 = vmatprep.subr.mxu0 0.0
        %425 = vmatpush1.msra.mxu0 %v395
        %426 = vmatprep.subr.mxu0 0.0
        %427 = vmatpush1.msra.mxu0 %v394
        %428 = vmatprep.subr.mxu0 0.0
        %429 = vmatpush1.msra.mxu0 %v393
        %430 = vmatprep.subr.mxu0 0.0
        %431 = vmatpush1.msra.mxu0 %v392
        %432 = vmatprep.subr.mxu0 0.0
        %433 = vmatpush2.msra.mxu0 0.0
        %434 = vmatprep.subr.mxu0 0.0
        %435 = vmatpush2.msra.mxu0 0.0
        %436 = vmatprep.subr.mxu0 0.0
        %437 = vmatpush2.msra.mxu0 0.0
        %438 = vmatprep.subr.mxu0 0.0
        %439 = vmatpush2.msra.mxu0 0.0
        %440 = vmatprep.subr.mxu0 0.0
        %441 = vmatpush2.msra.mxu0 0.0
        %442 = vmatprep.subr.mxu0 0.0
        %443 = vmatpush2.msra.mxu0 0.0
        %444 = vmatprep.subr.mxu0 0.0
        %445 = vmatpush2.msra.mxu0 0.0
        %446 = vmatprep.subr.mxu0 0.0
        %447 = vmatpush2.msra.mxu0 0.0
        %448 = vmatprep.subr.mxu0 0.0
        %449 = vmatpush2.msra.mxu0 0.0
        %450 = vmatprep.subr.mxu0 0.0
        %451 = vmatpush2.msra.mxu0 0.0
        %452 = vmatprep.subr.mxu0 0.0
        %453 = vmatpush2.msra.mxu0 0.0
        %454 = vmatprep.subr.mxu0 0.0
        %455 = vmatpush2.msra.mxu0 0.0
        %456 = vmatprep.subr.mxu0 0.0
        %457 = vmatpush2.msra.mxu0 0.0
        %458 = vmatprep.subr.mxu0 0.0
        %459 = vmatpush2.msra.mxu0 0.0
        %460 = vmatprep.subr.mxu0 0.0
        %461 = vmatpush2.msra.mxu0 0.0
        %462 = vmatprep.subr.mxu0 0.0
        %463 = vmatpush2.msra.mxu0 0.0
        %464 = vmatprep.mubr.f32.mxu0 0.0
        %465 = vmatmul.mubr.f32.gmra.mxu0 %v398
        %v466 = vpop.f32.mrf.mxu0
        %v467 = vadd.f32 0.0, %v466
        %v468 = vpop.f32.mrf.mxu0
        %469 = vdwg.mxu0
        %v470 = vadd.f32 %v389, %v467
        %471 = vst [vmem:[#allocation2] sm:$0xff] %v470
        %v472 = vld [vmem:[#allocation2] sm:$0xff]
        %v473 = vld [vmem:[%s318] sm:$0xff]
        %s474 = sadd.s32 %s383, 32
        %s475 = scalar_lea.vmem [#allocation8], %s474
        %v476 = vld [vmem:[%s475] sm:$0xff]
        %v477 = vld [vmem:[%s475 + $0x8] sm:$0xff]
        %v478 = vld [vmem:[%s475 + $0x10] sm:$0xff]
        %v479 = vld [vmem:[%s475 + $0x18] sm:$0xff]
        %v481 = vsel %vm396, %v473, 0
        %483 = vmatprep.subr.mxu0 0.0
        %484 = vmatpush1.msra.mxu0 0.0
        %485 = vmatprep.subr.mxu0 0.0
        %486 = vmatpush1.msra.mxu0 0.0
        %487 = vmatprep.subr.mxu0 0.0
        %488 = vmatpush1.msra.mxu0 0.0
        %489 = vmatprep.subr.mxu0 0.0
        %490 = vmatpush1.msra.mxu0 0.0
        %491 = vmatprep.subr.mxu0 0.0
        %492 = vmatpush1.msra.mxu0 0.0
        %493 = vmatprep.subr.mxu0 0.0
        %494 = vmatpush1.msra.mxu0 0.0
        %495 = vmatprep.subr.mxu0 0.0
        %496 = vmatpush1.msra.mxu0 0.0
        %497 = vmatprep.subr.mxu0 0.0
        %498 = vmatpush1.msra.mxu0 0.0
        %499 = vmatprep.subr.mxu0 0.0
        %500 = vmatpush1.msra.mxu0 0.0
        %501 = vmatprep.subr.mxu0 0.0
        %502 = vmatpush1.msra.mxu0 0.0
        %503 = vmatprep.subr.mxu0 0.0
        %504 = vmatpush1.msra.mxu0 0.0
        %505 = vmatprep.subr.mxu0 0.0
        %506 = vmatpush1.msra.mxu0 0.0
        %507 = vmatprep.subr.mxu0 0.0
        %508 = vmatpush1.msra.mxu0 %v479
        %509 = vmatprep.subr.mxu0 0.0
        %510 = vmatpush1.msra.mxu0 %v478
        %511 = vmatprep.subr.mxu0 0.0
        %512 = vmatpush1.msra.mxu0 %v477
        %513 = vmatprep.subr.mxu0 0.0
        %514 = vmatpush1.msra.mxu0 %v476
        %515 = vmatprep.subr.mxu0 0.0
        %516 = vmatpush2.msra.mxu0 0.0
        %517 = vmatprep.subr.mxu0 0.0
        %518 = vmatpush2.msra.mxu0 0.0
        %519 = vmatprep.subr.mxu0 0.0
        %520 = vmatpush2.msra.mxu0 0.0
        %521 = vmatprep.subr.mxu0 0.0
        %522 = vmatpush2.msra.mxu0 0.0
        %523 = vmatprep.subr.mxu0 0.0
        %524 = vmatpush2.msra.mxu0 0.0
        %525 = vmatprep.subr.mxu0 0.0
        %526 = vmatpush2.msra.mxu0 0.0
        %527 = vmatprep.subr.mxu0 0.0
        %528 = vmatpush2.msra.mxu0 0.0
        %529 = vmatprep.subr.mxu0 0.0
        %530 = vmatpush2.msra.mxu0 0.0
        %531 = vmatprep.subr.mxu0 0.0
        %532 = vmatpush2.msra.mxu0 0.0
        %533 = vmatprep.subr.mxu0 0.0
        %534 = vmatpush2.msra.mxu0 0.0
        %535 = vmatprep.subr.mxu0 0.0
        %536 = vmatpush2.msra.mxu0 0.0
        %537 = vmatprep.subr.mxu0 0.0
        %538 = vmatpush2.msra.mxu0 0.0
        %539 = vmatprep.subr.mxu0 0.0
        %540 = vmatpush2.msra.mxu0 0.0
        %541 = vmatprep.subr.mxu0 0.0
        %542 = vmatpush2.msra.mxu0 0.0
        %543 = vmatprep.subr.mxu0 0.0
        %544 = vmatpush2.msra.mxu0 0.0
        %545 = vmatprep.subr.mxu0 0.0
        %546 = vmatpush2.msra.mxu0 0.0
        %547 = vmatprep.mubr.f32.mxu0 0.0
        %548 = vmatmul.mubr.f32.gmra.mxu0 %v481
        %v549 = vpop.f32.mrf.mxu0
        %v550 = vadd.f32 0.0, %v549
        %v551 = vpop.f32.mrf.mxu0
        %552 = vdwg.mxu0
        %v553 = vadd.f32 %v472, %v550
        %554 = vst [vmem:[#allocation2] sm:$0xff] %v553
        %v555 = vld [vmem:[#allocation2] sm:$0xff]
        %v556 = vld [vmem:[%s327] sm:$0xff]
        %s557 = sadd.s32 %s383, 64
        %s558 = scalar_lea.vmem [#allocation8], %s557
        %v559 = vld [vmem:[%s558] sm:$0xff]
        %v560 = vld [vmem:[%s558 + $0x8] sm:$0xff]
        %v561 = vld [vmem:[%s558 + $0x10] sm:$0xff]
        %v562 = vld [vmem:[%s558 + $0x18] sm:$0xff]
        %v564 = vsel %vm396, %v556, 0
        %566 = vmatprep.subr.mxu0 0.0
        %567 = vmatpush1.msra.mxu0 0.0
        %568 = vmatprep.subr.mxu0 0.0
        %569 = vmatpush1.msra.mxu0 0.0
        %570 = vmatprep.subr.mxu0 0.0
        %571 = vmatpush1.msra.mxu0 0.0
        %572 = vmatprep.subr.mxu0 0.0
        %573 = vmatpush1.msra.mxu0 0.0
        %574 = vmatprep.subr.mxu0 0.0
        %575 = vmatpush1.msra.mxu0 0.0
        %576 = vmatprep.subr.mxu0 0.0
        %577 = vmatpush1.msra.mxu0 0.0
        %578 = vmatprep.subr.mxu0 0.0
        %579 = vmatpush1.msra.mxu0 0.0
        %580 = vmatprep.subr.mxu0 0.0
        %581 = vmatpush1.msra.mxu0 0.0
        %582 = vmatprep.subr.mxu0 0.0
        %583 = vmatpush1.msra.mxu0 0.0
        %584 = vmatprep.subr.mxu0 0.0
        %585 = vmatpush1.msra.mxu0 0.0
        %586 = vmatprep.subr.mxu0 0.0
        %587 = vmatpush1.msra.mxu0 0.0
        %588 = vmatprep.subr.mxu0 0.0
        %589 = vmatpush1.msra.mxu0 0.0
        %590 = vmatprep.subr.mxu0 0.0
        %591 = vmatpush1.msra.mxu0 %v562
        %592 = vmatprep.subr.mxu0 0.0
        %593 = vmatpush1.msra.mxu0 %v561
        %594 = vmatprep.subr.mxu0 0.0
        %595 = vmatpush1.msra.mxu0 %v560
        %596 = vmatprep.subr.mxu0 0.0
        %597 = vmatpush1.msra.mxu0 %v559
        %598 = vmatprep.subr.mxu0 0.0
        %599 = vmatpush2.msra.mxu0 0.0
        %600 = vmatprep.subr.mxu0 0.0
        %601 = vmatpush2.msra.mxu0 0.0
        %602 = vmatprep.subr.mxu0 0.0
        %603 = vmatpush2.msra.mxu0 0.0
        %604 = vmatprep.subr.mxu0 0.0
        %605 = vmatpush2.msra.mxu0 0.0
        %606 = vmatprep.subr.mxu0 0.0
        %607 = vmatpush2.msra.mxu0 0.0
        %608 = vmatprep.subr.mxu0 0.0
        %609 = vmatpush2.msra.mxu0 0.0
        %610 = vmatprep.subr.mxu0 0.0
        %611 = vmatpush2.msra.mxu0 0.0
        %612 = vmatprep.subr.mxu0 0.0
        %613 = vmatpush2.msra.mxu0 0.0
        %614 = vmatprep.subr.mxu0 0.0
        %615 = vmatpush2.msra.mxu0 0.0
        %616 = vmatprep.subr.mxu0 0.0
        %617 = vmatpush2.msra.mxu0 0.0
        %618 = vmatprep.subr.mxu0 0.0
        %619 = vmatpush2.msra.mxu0 0.0
        %620 = vmatprep.subr.mxu0 0.0
        %621 = vmatpush2.msra.mxu0 0.0
        %622 = vmatprep.subr.mxu0 0.0
        %623 = vmatpush2.msra.mxu0 0.0
        %624 = vmatprep.subr.mxu0 0.0
        %625 = vmatpush2.msra.mxu0 0.0
        %626 = vmatprep.subr.mxu0 0.0
        %627 = vmatpush2.msra.mxu0 0.0
        %628 = vmatprep.subr.mxu0 0.0
        %629 = vmatpush2.msra.mxu0 0.0
        %630 = vmatprep.mubr.f32.mxu0 0.0
        %631 = vmatmul.mubr.f32.gmra.mxu0 %v564
        %v632 = vpop.f32.mrf.mxu0
        %v633 = vadd.f32 0.0, %v632
        %v634 = vpop.f32.mrf.mxu0
        %635 = vdwg.mxu0
        %v636 = vadd.f32 %v555, %v633
        %637 = vst [vmem:[#allocation2] sm:$0xff] %v636
        // Predicated region
        $region61: #{dense_pass.1} parent=39 // pred_check
          %p638 = pneg %p384
        $region62: #{dense_pass.1} parent=39 // pred_check_branch
          %640 = sbr.rel (%p638) target = $region64
        $region63: #{dense_pass.1} parent=39 // pred_region
          %v641 = vld [vmem:[#allocation2] sm:$0xff]
          %v642 = vld [vmem:[%s375] sm:$0x1]
          %v644 = vlaneseq
          %v645 = vshrl.u32 %v644, 7
          %v646 = vsub.s32 0, %v645
          %v647 = vrot.slane %v642, %v646
          %v649 = vadd.f32 %v641, %v647
          %650 = vst [vmem:[%s382] sm:$0xff] %v649
        $region64: #{dense_pass.1} parent=39 // pred_fallthru
          _
        %p651 = scmp.lt.s32.totalorder %s29, 1
        %s652 = scalar_select %p651, %s29, 1
        %p653 = scmp.lt.s32.totalorder %s28, 0
        %s654 = scalar_select %p653, %s28, 0
        %s655 = sadd.s32 %s654, %s652
        %s656 = smul.addr %s655, 8
        %s657 = scalar_lea.vmem %s5, %s656
        // Predicated region
        $region65: #{dense_pass.1} parent=39 // pred_check
          %p658 = pneg %p198
        $region66: #{dense_pass.1} parent=39 // pred_check_branch
          %660 = sbr.rel (%p658) target = $region68
        $region67: #{dense_pass.1} parent=39 // pred_region
          _
        $region68: #{dense_pass.1} parent=39 // pred_fallthru
          _
      $region40: #{dense_pass.1} parent=5 // pred_fallthru
        _
      %p661 = scmp.le.s32.totalorder 2, %s18
      // Predicated region
      $region69: #{dense_pass.1} parent=5 // pred_check
        %p662 = pneg %p661
      $region70: #{dense_pass.1} parent=5 // pred_check_branch
        %664 = sbr.rel (%p662) target = $region72
      $region71: #{dense_pass.1} parent=5 // pred_region
        %s665 = ssub.s32 %s18, 2
        // Predicated region
        $region73: #{dense_pass.1} parent=71 // pred_check
          %p666 = pneg %p204
        $region74: #{dense_pass.1} parent=71 // pred_check_branch
          %668 = sbr.rel (%p666) target = $region76
        $region75: #{dense_pass.1} parent=71 // pred_region
          %p669 = scmp.lt.s32.totalorder %s32, 1
          %s670 = scalar_select %p669, %s32, 1
          %p671 = scmp.lt.s32.totalorder %s31, 0
          %s672 = scalar_select %p671, %s31, 0
          %s673 = sadd.s32 %s672, %s670
          %s674 = smul.addr %s673, 8
          %s675 = scalar_lea.vmem %s5, %s674
        $region76: #{dense_pass.1} parent=71 // pred_fallthru
          _
      $region72: #{dense_pass.1} parent=5 // pred_fallthru
        _
    $region6: #{dense_pass.1} parent=1 // loop_footer
      %s22 = sadd.s32 1, %s18
    $region7: #{dense_pass.1} parent=1 // loop_footer_branch
      %17 = sbr.rel target = $region3
    $region8: #{dense_pass.1} parent=1 // loop_exit
      _
    %676 = vsyncpa [#allocation4], 1
    %s677 = scalar_lea.sflag [#allocation4], 1
    %678 = vsyncpa %s677, 1
    %679 = vsyncpa [#allocation6], 1
    %s680 = scalar_lea.sflag [#allocation6], 1
    %681 = vsyncpa %s680, 1
    %682 = vsyncpa [#allocation9], 1

</llo_original>
